<compile_context>
chip_gen: v7x
topology: tpu7x:2x2x1
jax: 0.10.0
libtpu: 0.0.40
codegen_flags: <defaults>
</compile_context>

<pallas_src>
import math

import jax
import jax.numpy as jnp
from jax.experimental import pallas as pl
from jax.experimental.pallas import tpu as pltpu


def _dilate_erode_kernel(xt_ref, wd_ref, we_ref, out_ref):
    # xt_ref : (F, BB)       x transposed -> batch on lanes
    # wd_ref : (ND, F + 1)   dilations^T, last column is the bias row
    # we_ref : (NE, F + 1)   erosions^T,  last column is the bias row
    # out_ref: (NE + ND, BB) transposed output: eroded rows first, then dilated
    f_dim, bb = xt_ref.shape
    nd = wd_ref.shape[0]
    ne = we_ref.shape[0]

    wd = wd_ref[...]                                   # tiny, load once
    we = we_ref[...]

    # The appended bias feature equals 0, so it simply seeds the running
    # max / min (no concatenated zero column, no -inf/+inf init needed).
    dacc = jnp.broadcast_to(wd[:, f_dim:f_dim + 1], (nd, bb))   # (ND, BB)
    eacc = jnp.broadcast_to(-we[:, f_dim:f_dim + 1], (ne, bb))  # (NE, BB)

    # Running max / min over the small static feature axis: pure VPU work,
    # fully unrolled with static slices; only (N, BB) stays live.
    for f in range(f_dim):
        xrow = xt_ref[f:f + 1, :]                      # (1, BB), batch on lanes
        dacc = jnp.maximum(dacc, xrow + wd[:, f:f + 1])
        eacc = jnp.minimum(eacc, xrow - we[:, f:f + 1])

    # Lane-dense stores (all 128 lanes useful).
    out_ref[0:ne, :] = eacc.astype(out_ref.dtype)
    out_ref[ne:ne + nd, :] = dacc.astype(out_ref.dtype)


def _round_up(n: int, m: int) -> int:
    return ((n + m - 1) // m) * m


@jax.jit
def dilate_erode(x, dilations_t, erosions_t):
    """Forward pass.

    x           : (B, F)
    dilations_t : (ND, F + 1)  pre-transposed weights (stored this way at init)
    erosions_t  : (NE, F + 1)
    returns     : (B, NE + ND) = concat([eroded, dilated], axis=1)
    """
    B, F = x.shape
    nd = dilations_t.shape[0]
    ne = erosions_t.shape[0]

    if nd == 0 or ne == 0:
        # Degenerate configs the module allows; trivial, leave to XLA fusion.
        xp = jnp.concatenate([x, jnp.zeros((B, 1), x.dtype)], axis=1)
        dil = (jnp.max(xp[:, None, :] + dilations_t[None], axis=-1)
               if nd > 0 else jnp.zeros((B, 0), x.dtype))
        ero = (jnp.min(xp[:, None, :] - erosions_t[None], axis=-1)
               if ne > 0 else jnp.zeros((B, 0), x.dtype))
        return jnp.concatenate([ero, dil], axis=1)

    n_out = ne + nd
    wd_t = dilations_t.astype(x.dtype)
    we_t = erosions_t.astype(x.dtype)

    # Batch padded to a multiple of 128 lanes; tile is the largest of
    # {512, 256, 128} dividing it (512-row tiles ~ HBM-roofline sweet spot,
    # and tiny enough for v7x's 64 MiB VMEM with double buffering).
    b_pad = _round_up(B, 128)
    bb = next(t for t in (512, 256, 128) if b_pad % t == 0)
    grid = (b_pad // bb,)

    # Put batch on the lane axis.  Padding lanes hold zeros; their outputs are
    # sliced away below, so no masking is needed in the kernel.
    xt = x.T                                           # (F, B)
    if b_pad != B:
        xt = jnp.pad(xt, ((0, 0), (0, b_pad - B)))     # (F, b_pad)

    out_t = pl.pallas_call(
        _dilate_erode_kernel,
        out_shape=jax.ShapeDtypeStruct((n_out, b_pad), x.dtype),
        grid=grid,
        in_specs=[
            pl.BlockSpec((F, bb), lambda i: (0, i)),          # x^T batch tile
            pl.BlockSpec((nd, F + 1), lambda i: (0, 0)),      # weights: resident
            pl.BlockSpec((ne, F + 1), lambda i: (0, 0)),
        ],
        out_specs=pl.BlockSpec((n_out, bb), lambda i: (0, i)),
        compiler_params=pltpu.CompilerParams(
            dimension_semantics=("parallel",)),
    )(xt, wd_t, we_t)

    return out_t[:, :B].T                              # (B, NE + ND)


def _reference(x, dilations, erosions):
    """Pure-JAX mirror of the torch forward (weights in original (F+1, N) layout)."""
    B = x.shape[0]
    xp = jnp.concatenate([x, jnp.zeros((B, 1), x.dtype)], axis=1)   # (B, F+1)
    dilated = jnp.max(xp[:, :, None] + dilations[None, :, :], axis=1)
    eroded = jnp.min(xp[:, :, None] - erosions[None, :, :], axis=1)
    return jnp.concatenate([eroded, dilated], axis=1)


def _xavier_uniform(key, rows, cols):
    # torch xavier_uniform_ on a (rows, cols) tensor.
    bound = math.sqrt(6.0 / (rows + cols))
    return jax.random.uniform(key, (rows, cols), jnp.float32, -bound, bound)


if __name__ == "__main__":
    batch = 2
    in_features = 16
    number_of_dilations = 8
    number_of_erosions = 8

    key = jax.random.PRNGKey(0)
    k_x, k_d, k_e = jax.random.split(key, 3)

    x = jax.random.normal(k_x, (batch, in_features), dtype=jnp.float32)
    dilations = _xavier_uniform(k_d, in_features + 1, number_of_dilations)  # (F+1, ND)
    erosions = _xavier_uniform(k_e, in_features + 1, number_of_erosions)    # (F+1, NE)
    # NOTE: dilation_bias / erosion_bias exist in the module but are unused in forward.

    # Parameters stored pre-transposed at "init time" -> no per-call transpose.
    dilations_t = jnp.asarray(dilations.T)   # (ND, F+1)
    erosions_t = jnp.asarray(erosions.T)     # (NE, F+1)

    out = jax.block_until_ready(dilate_erode(x, dilations_t, erosions_t))
    ref = _reference(x, dilations, erosions)

    assert out.shape == (batch, number_of_erosions + number_of_dilations), out.shape
    assert jnp.allclose(out, ref, atol=1e-6, rtol=1e-6), (out, ref)
    print("KERNEL_OK")
</pallas_src>

<mosaic_0001>
module attributes {stable_mosaic.version = 11 : i64} {
  func.func @_dilate_erode_kernel(%arg0: i32, %arg1: memref<16x128xf32, #tpu.memory_space<vmem>>, %arg2: memref<8x17xf32, #tpu.memory_space<vmem>>, %arg3: memref<8x17xf32, #tpu.memory_space<vmem>>, %arg4: memref<16x128xf32, #tpu.memory_space<vmem>>) attributes {dimension_semantics = [#tpu.dimension_semantics<parallel>], iteration_bounds = array<i64: 1>, scalar_prefetch = 0 : i64, scratch_operands = 0 : i64, tpu.core_type = #tpu.core_type<tc>, window_params = [{transform_indices = @transform_0, window_bounds = array<i64: 16, 128>}, {pipeline_mode = #tpu.pipeline_mode<synchronous>, transform_indices = @transform_1, window_bounds = array<i64: 8, 17>}, {pipeline_mode = #tpu.pipeline_mode<synchronous>, transform_indices = @transform_2, window_bounds = array<i64: 8, 17>}, {transform_indices = @transform_3, window_bounds = array<i64: 16, 128>}]} {
    %c0 = arith.constant 0 : index
    %c0_0 = arith.constant 0 : index
    %0 = vector.load %arg2[%c0, %c0_0] : memref<8x17xf32, #tpu.memory_space<vmem>>, vector<8x17xf32>
    %c0_1 = arith.constant 0 : index
    %c0_2 = arith.constant 0 : index
    %1 = vector.load %arg3[%c0_1, %c0_2] : memref<8x17xf32, #tpu.memory_space<vmem>>, vector<8x17xf32>
    %2 = vector.extract_strided_slice %0 {offsets = [0, 16], sizes = [8, 1], strides = [1, 1]} : vector<8x17xf32> to vector<8x1xf32>
    %3 = vector.shape_cast %2 : vector<8x1xf32> to vector<8x1xf32>
    %4 = vector.broadcast %3 : vector<8x1xf32> to vector<8x128xf32>
    %5 = vector.extract_strided_slice %1 {offsets = [0, 16], sizes = [8, 1], strides = [1, 1]} : vector<8x17xf32> to vector<8x1xf32>
    %cst = arith.constant 0.000000e+00 : f32
    %6 = vector.broadcast %cst : f32 to vector<8x1xf32>
    %7 = arith.subf %6, %5 : vector<8x1xf32>
    %8 = vector.shape_cast %7 : vector<8x1xf32> to vector<8x1xf32>
    %9 = vector.broadcast %8 : vector<8x1xf32> to vector<8x128xf32>
    %c0_3 = arith.constant 0 : index
    %c0_4 = arith.constant 0 : index
    %10 = vector.load %arg1[%c0_3, %c0_4] : memref<16x128xf32, #tpu.memory_space<vmem>>, vector<1x128xf32>
    %11 = vector.extract_strided_slice %0 {offsets = [0, 0], sizes = [8, 1], strides = [1, 1]} : vector<8x17xf32> to vector<8x1xf32>
    %12 = vector.broadcast %10 : vector<1x128xf32> to vector<8x128xf32>
    %13 = vector.broadcast %11 : vector<8x1xf32> to vector<8x128xf32>
    %14 = arith.addf %12, %13 : vector<8x128xf32>
    %15 = arith.maximumf %4, %14 : vector<8x128xf32>
    %16 = vector.extract_strided_slice %1 {offsets = [0, 0], sizes = [8, 1], strides = [1, 1]} : vector<8x17xf32> to vector<8x1xf32>
    %17 = vector.broadcast %10 : vector<1x128xf32> to vector<8x128xf32>
    %18 = vector.broadcast %16 : vector<8x1xf32> to vector<8x128xf32>
    %19 = arith.subf %17, %18 : vector<8x128xf32>
    %20 = arith.minimumf %9, %19 : vector<8x128xf32>
    %c1 = arith.constant 1 : index
    %c0_5 = arith.constant 0 : index
    %21 = vector.load %arg1[%c1, %c0_5] : memref<16x128xf32, #tpu.memory_space<vmem>>, vector<1x128xf32>
    %22 = vector.extract_strided_slice %0 {offsets = [0, 1], sizes = [8, 1], strides = [1, 1]} : vector<8x17xf32> to vector<8x1xf32>
    %23 = vector.broadcast %21 : vector<1x128xf32> to vector<8x128xf32>
    %24 = vector.broadcast %22 : vector<8x1xf32> to vector<8x128xf32>
    %25 = arith.addf %23, %24 : vector<8x128xf32>
    %26 = arith.maximumf %15, %25 : vector<8x128xf32>
    %27 = vector.extract_strided_slice %1 {offsets = [0, 1], sizes = [8, 1], strides = [1, 1]} : vector<8x17xf32> to vector<8x1xf32>
    %28 = vector.broadcast %21 : vector<1x128xf32> to vector<8x128xf32>
    %29 = vector.broadcast %27 : vector<8x1xf32> to vector<8x128xf32>
    %30 = arith.subf %28, %29 : vector<8x128xf32>
    %31 = arith.minimumf %20, %30 : vector<8x128xf32>
    %c2 = arith.constant 2 : index
    %c0_6 = arith.constant 0 : index
    %32 = vector.load %arg1[%c2, %c0_6] : memref<16x128xf32, #tpu.memory_space<vmem>>, vector<1x128xf32>
    %33 = vector.extract_strided_slice %0 {offsets = [0, 2], sizes = [8, 1], strides = [1, 1]} : vector<8x17xf32> to vector<8x1xf32>
    %34 = vector.broadcast %32 : vector<1x128xf32> to vector<8x128xf32>
    %35 = vector.broadcast %33 : vector<8x1xf32> to vector<8x128xf32>
    %36 = arith.addf %34, %35 : vector<8x128xf32>
    %37 = arith.maximumf %26, %36 : vector<8x128xf32>
    %38 = vector.extract_strided_slice %1 {offsets = [0, 2], sizes = [8, 1], strides = [1, 1]} : vector<8x17xf32> to vector<8x1xf32>
    %39 = vector.broadcast %32 : vector<1x128xf32> to vector<8x128xf32>
    %40 = vector.broadcast %38 : vector<8x1xf32> to vector<8x128xf32>
    %41 = arith.subf %39, %40 : vector<8x128xf32>
    %42 = arith.minimumf %31, %41 : vector<8x128xf32>
    %c3 = arith.constant 3 : index
    %c0_7 = arith.constant 0 : index
    %43 = vector.load %arg1[%c3, %c0_7] : memref<16x128xf32, #tpu.memory_space<vmem>>, vector<1x128xf32>
    %44 = vector.extract_strided_slice %0 {offsets = [0, 3], sizes = [8, 1], strides = [1, 1]} : vector<8x17xf32> to vector<8x1xf32>
    %45 = vector.broadcast %43 : vector<1x128xf32> to vector<8x128xf32>
    %46 = vector.broadcast %44 : vector<8x1xf32> to vector<8x128xf32>
    %47 = arith.addf %45, %46 : vector<8x128xf32>
    %48 = arith.maximumf %37, %47 : vector<8x128xf32>
    %49 = vector.extract_strided_slice %1 {offsets = [0, 3], sizes = [8, 1], strides = [1, 1]} : vector<8x17xf32> to vector<8x1xf32>
    %50 = vector.broadcast %43 : vector<1x128xf32> to vector<8x128xf32>
    %51 = vector.broadcast %49 : vector<8x1xf32> to vector<8x128xf32>
    %52 = arith.subf %50, %51 : vector<8x128xf32>
    %53 = arith.minimumf %42, %52 : vector<8x128xf32>
    %c4 = arith.constant 4 : index
    %c0_8 = arith.constant 0 : index
    %54 = vector.load %arg1[%c4, %c0_8] : memref<16x128xf32, #tpu.memory_space<vmem>>, vector<1x128xf32>
    %55 = vector.extract_strided_slice %0 {offsets = [0, 4], sizes = [8, 1], strides = [1, 1]} : vector<8x17xf32> to vector<8x1xf32>
    %56 = vector.broadcast %54 : vector<1x128xf32> to vector<8x128xf32>
    %57 = vector.broadcast %55 : vector<8x1xf32> to vector<8x128xf32>
    %58 = arith.addf %56, %57 : vector<8x128xf32>
    %59 = arith.maximumf %48, %58 : vector<8x128xf32>
    %60 = vector.extract_strided_slice %1 {offsets = [0, 4], sizes = [8, 1], strides = [1, 1]} : vector<8x17xf32> to vector<8x1xf32>
    %61 = vector.broadcast %54 : vector<1x128xf32> to vector<8x128xf32>
    %62 = vector.broadcast %60 : vector<8x1xf32> to vector<8x128xf32>
    %63 = arith.subf %61, %62 : vector<8x128xf32>
    %64 = arith.minimumf %53, %63 : vector<8x128xf32>
    %c5 = arith.constant 5 : index
    %c0_9 = arith.constant 0 : index
    %65 = vector.load %arg1[%c5, %c0_9] : memref<16x128xf32, #tpu.memory_space<vmem>>, vector<1x128xf32>
    %66 = vector.extract_strided_slice %0 {offsets = [0, 5], sizes = [8, 1], strides = [1, 1]} : vector<8x17xf32> to vector<8x1xf32>
    %67 = vector.broadcast %65 : vector<1x128xf32> to vector<8x128xf32>
    %68 = vector.broadcast %66 : vector<8x1xf32> to vector<8x128xf32>
    %69 = arith.addf %67, %68 : vector<8x128xf32>
    %70 = arith.maximumf %59, %69 : vector<8x128xf32>
    %71 = vector.extract_strided_slice %1 {offsets = [0, 5], sizes = [8, 1], strides = [1, 1]} : vector<8x17xf32> to vector<8x1xf32>
    %72 = vector.broadcast %65 : vector<1x128xf32> to vector<8x128xf32>
    %73 = vector.broadcast %71 : vector<8x1xf32> to vector<8x128xf32>
    %74 = arith.subf %72, %73 : vector<8x128xf32>
    %75 = arith.minimumf %64, %74 : vector<8x128xf32>
    %c6 = arith.constant 6 : index
    %c0_10 = arith.constant 0 : index
    %76 = vector.load %arg1[%c6, %c0_10] : memref<16x128xf32, #tpu.memory_space<vmem>>, vector<1x128xf32>
    %77 = vector.extract_strided_slice %0 {offsets = [0, 6], sizes = [8, 1], strides = [1, 1]} : vector<8x17xf32> to vector<8x1xf32>
    %78 = vector.broadcast %76 : vector<1x128xf32> to vector<8x128xf32>
    %79 = vector.broadcast %77 : vector<8x1xf32> to vector<8x128xf32>
    %80 = arith.addf %78, %79 : vector<8x128xf32>
    %81 = arith.maximumf %70, %80 : vector<8x128xf32>
    %82 = vector.extract_strided_slice %1 {offsets = [0, 6], sizes = [8, 1], strides = [1, 1]} : vector<8x17xf32> to vector<8x1xf32>
    %83 = vector.broadcast %76 : vector<1x128xf32> to vector<8x128xf32>
    %84 = vector.broadcast %82 : vector<8x1xf32> to vector<8x128xf32>
    %85 = arith.subf %83, %84 : vector<8x128xf32>
    %86 = arith.minimumf %75, %85 : vector<8x128xf32>
    %c7 = arith.constant 7 : index
    %c0_11 = arith.constant 0 : index
    %87 = vector.load %arg1[%c7, %c0_11] : memref<16x128xf32, #tpu.memory_space<vmem>>, vector<1x128xf32>
    %88 = vector.extract_strided_slice %0 {offsets = [0, 7], sizes = [8, 1], strides = [1, 1]} : vector<8x17xf32> to vector<8x1xf32>
    %89 = vector.broadcast %87 : vector<1x128xf32> to vector<8x128xf32>
    %90 = vector.broadcast %88 : vector<8x1xf32> to vector<8x128xf32>
    %91 = arith.addf %89, %90 : vector<8x128xf32>
    %92 = arith.maximumf %81, %91 : vector<8x128xf32>
    %93 = vector.extract_strided_slice %1 {offsets = [0, 7], sizes = [8, 1], strides = [1, 1]} : vector<8x17xf32> to vector<8x1xf32>
    %94 = vector.broadcast %87 : vector<1x128xf32> to vector<8x128xf32>
    %95 = vector.broadcast %93 : vector<8x1xf32> to vector<8x128xf32>
    %96 = arith.subf %94, %95 : vector<8x128xf32>
    %97 = arith.minimumf %86, %96 : vector<8x128xf32>
    %c8 = arith.constant 8 : index
    %c0_12 = arith.constant 0 : index
    %98 = vector.load %arg1[%c8, %c0_12] : memref<16x128xf32, #tpu.memory_space<vmem>>, vector<1x128xf32>
    %99 = vector.extract_strided_slice %0 {offsets = [0, 8], sizes = [8, 1], strides = [1, 1]} : vector<8x17xf32> to vector<8x1xf32>
    %100 = vector.broadcast %98 : vector<1x128xf32> to vector<8x128xf32>
    %101 = vector.broadcast %99 : vector<8x1xf32> to vector<8x128xf32>
    %102 = arith.addf %100, %101 : vector<8x128xf32>
    %103 = arith.maximumf %92, %102 : vector<8x128xf32>
    %104 = vector.extract_strided_slice %1 {offsets = [0, 8], sizes = [8, 1], strides = [1, 1]} : vector<8x17xf32> to vector<8x1xf32>
    %105 = vector.broadcast %98 : vector<1x128xf32> to vector<8x128xf32>
    %106 = vector.broadcast %104 : vector<8x1xf32> to vector<8x128xf32>
    %107 = arith.subf %105, %106 : vector<8x128xf32>
    %108 = arith.minimumf %97, %107 : vector<8x128xf32>
    %c9 = arith.constant 9 : index
    %c0_13 = arith.constant 0 : index
    %109 = vector.load %arg1[%c9, %c0_13] : memref<16x128xf32, #tpu.memory_space<vmem>>, vector<1x128xf32>
    %110 = vector.extract_strided_slice %0 {offsets = [0, 9], sizes = [8, 1], strides = [1, 1]} : vector<8x17xf32> to vector<8x1xf32>
    %111 = vector.broadcast %109 : vector<1x128xf32> to vector<8x128xf32>
    %112 = vector.broadcast %110 : vector<8x1xf32> to vector<8x128xf32>
    %113 = arith.addf %111, %112 : vector<8x128xf32>
    %114 = arith.maximumf %103, %113 : vector<8x128xf32>
    %115 = vector.extract_strided_slice %1 {offsets = [0, 9], sizes = [8, 1], strides = [1, 1]} : vector<8x17xf32> to vector<8x1xf32>
    %116 = vector.broadcast %109 : vector<1x128xf32> to vector<8x128xf32>
    %117 = vector.broadcast %115 : vector<8x1xf32> to vector<8x128xf32>
    %118 = arith.subf %116, %117 : vector<8x128xf32>
    %119 = arith.minimumf %108, %118 : vector<8x128xf32>
    %c10 = arith.constant 10 : index
    %c0_14 = arith.constant 0 : index
    %120 = vector.load %arg1[%c10, %c0_14] : memref<16x128xf32, #tpu.memory_space<vmem>>, vector<1x128xf32>
    %121 = vector.extract_strided_slice %0 {offsets = [0, 10], sizes = [8, 1], strides = [1, 1]} : vector<8x17xf32> to vector<8x1xf32>
    %122 = vector.broadcast %120 : vector<1x128xf32> to vector<8x128xf32>
    %123 = vector.broadcast %121 : vector<8x1xf32> to vector<8x128xf32>
    %124 = arith.addf %122, %123 : vector<8x128xf32>
    %125 = arith.maximumf %114, %124 : vector<8x128xf32>
    %126 = vector.extract_strided_slice %1 {offsets = [0, 10], sizes = [8, 1], strides = [1, 1]} : vector<8x17xf32> to vector<8x1xf32>
    %127 = vector.broadcast %120 : vector<1x128xf32> to vector<8x128xf32>
    %128 = vector.broadcast %126 : vector<8x1xf32> to vector<8x128xf32>
    %129 = arith.subf %127, %128 : vector<8x128xf32>
    %130 = arith.minimumf %119, %129 : vector<8x128xf32>
    %c11 = arith.constant 11 : index
    %c0_15 = arith.constant 0 : index
    %131 = vector.load %arg1[%c11, %c0_15] : memref<16x128xf32, #tpu.memory_space<vmem>>, vector<1x128xf32>
    %132 = vector.extract_strided_slice %0 {offsets = [0, 11], sizes = [8, 1], strides = [1, 1]} : vector<8x17xf32> to vector<8x1xf32>
    %133 = vector.broadcast %131 : vector<1x128xf32> to vector<8x128xf32>
    %134 = vector.broadcast %132 : vector<8x1xf32> to vector<8x128xf32>
    %135 = arith.addf %133, %134 : vector<8x128xf32>
    %136 = arith.maximumf %125, %135 : vector<8x128xf32>
    %137 = vector.extract_strided_slice %1 {offsets = [0, 11], sizes = [8, 1], strides = [1, 1]} : vector<8x17xf32> to vector<8x1xf32>
    %138 = vector.broadcast %131 : vector<1x128xf32> to vector<8x128xf32>
    %139 = vector.broadcast %137 : vector<8x1xf32> to vector<8x128xf32>
    %140 = arith.subf %138, %139 : vector<8x128xf32>
    %141 = arith.minimumf %130, %140 : vector<8x128xf32>
    %c12 = arith.constant 12 : index
    %c0_16 = arith.constant 0 : index
    %142 = vector.load %arg1[%c12, %c0_16] : memref<16x128xf32, #tpu.memory_space<vmem>>, vector<1x128xf32>
    %143 = vector.extract_strided_slice %0 {offsets = [0, 12], sizes = [8, 1], strides = [1, 1]} : vector<8x17xf32> to vector<8x1xf32>
    %144 = vector.broadcast %142 : vector<1x128xf32> to vector<8x128xf32>
    %145 = vector.broadcast %143 : vector<8x1xf32> to vector<8x128xf32>
    %146 = arith.addf %144, %145 : vector<8x128xf32>
    %147 = arith.maximumf %136, %146 : vector<8x128xf32>
    %148 = vector.extract_strided_slice %1 {offsets = [0, 12], sizes = [8, 1], strides = [1, 1]} : vector<8x17xf32> to vector<8x1xf32>
    %149 = vector.broadcast %142 : vector<1x128xf32> to vector<8x128xf32>
    %150 = vector.broadcast %148 : vector<8x1xf32> to vector<8x128xf32>
    %151 = arith.subf %149, %150 : vector<8x128xf32>
    %152 = arith.minimumf %141, %151 : vector<8x128xf32>
    %c13 = arith.constant 13 : index
    %c0_17 = arith.constant 0 : index
    %153 = vector.load %arg1[%c13, %c0_17] : memref<16x128xf32, #tpu.memory_space<vmem>>, vector<1x128xf32>
    %154 = vector.extract_strided_slice %0 {offsets = [0, 13], sizes = [8, 1], strides = [1, 1]} : vector<8x17xf32> to vector<8x1xf32>
    %155 = vector.broadcast %153 : vector<1x128xf32> to vector<8x128xf32>
    %156 = vector.broadcast %154 : vector<8x1xf32> to vector<8x128xf32>
    %157 = arith.addf %155, %156 : vector<8x128xf32>
    %158 = arith.maximumf %147, %157 : vector<8x128xf32>
    %159 = vector.extract_strided_slice %1 {offsets = [0, 13], sizes = [8, 1], strides = [1, 1]} : vector<8x17xf32> to vector<8x1xf32>
    %160 = vector.broadcast %153 : vector<1x128xf32> to vector<8x128xf32>
    %161 = vector.broadcast %159 : vector<8x1xf32> to vector<8x128xf32>
    %162 = arith.subf %160, %161 : vector<8x128xf32>
    %163 = arith.minimumf %152, %162 : vector<8x128xf32>
    %c14 = arith.constant 14 : index
    %c0_18 = arith.constant 0 : index
    %164 = vector.load %arg1[%c14, %c0_18] : memref<16x128xf32, #tpu.memory_space<vmem>>, vector<1x128xf32>
    %165 = vector.extract_strided_slice %0 {offsets = [0, 14], sizes = [8, 1], strides = [1, 1]} : vector<8x17xf32> to vector<8x1xf32>
    %166 = vector.broadcast %164 : vector<1x128xf32> to vector<8x128xf32>
    %167 = vector.broadcast %165 : vector<8x1xf32> to vector<8x128xf32>
    %168 = arith.addf %166, %167 : vector<8x128xf32>
    %169 = arith.maximumf %158, %168 : vector<8x128xf32>
    %170 = vector.extract_strided_slice %1 {offsets = [0, 14], sizes = [8, 1], strides = [1, 1]} : vector<8x17xf32> to vector<8x1xf32>
    %171 = vector.broadcast %164 : vector<1x128xf32> to vector<8x128xf32>
    %172 = vector.broadcast %170 : vector<8x1xf32> to vector<8x128xf32>
    %173 = arith.subf %171, %172 : vector<8x128xf32>
    %174 = arith.minimumf %163, %173 : vector<8x128xf32>
    %c15 = arith.constant 15 : index
    %c0_19 = arith.constant 0 : index
    %175 = vector.load %arg1[%c15, %c0_19] : memref<16x128xf32, #tpu.memory_space<vmem>>, vector<1x128xf32>
    %176 = vector.extract_strided_slice %0 {offsets = [0, 15], sizes = [8, 1], strides = [1, 1]} : vector<8x17xf32> to vector<8x1xf32>
    %177 = vector.broadcast %175 : vector<1x128xf32> to vector<8x128xf32>
    %178 = vector.broadcast %176 : vector<8x1xf32> to vector<8x128xf32>
    %179 = arith.addf %177, %178 : vector<8x128xf32>
    %180 = arith.maximumf %169, %179 : vector<8x128xf32>
    %181 = vector.extract_strided_slice %1 {offsets = [0, 15], sizes = [8, 1], strides = [1, 1]} : vector<8x17xf32> to vector<8x1xf32>
    %182 = vector.broadcast %175 : vector<1x128xf32> to vector<8x128xf32>
    %183 = vector.broadcast %181 : vector<8x1xf32> to vector<8x128xf32>
    %184 = arith.subf %182, %183 : vector<8x128xf32>
    %185 = arith.minimumf %174, %184 : vector<8x128xf32>
    %c0_20 = arith.constant 0 : index
    %c0_21 = arith.constant 0 : index
    %186 = vector.load %arg4[%c0_20, %c0_21] : memref<16x128xf32, #tpu.memory_space<vmem>>, vector<8x128xf32>
    tpu.vector_store %arg4[%c0_20, %c0_21], %185 {strides = array<i32>} : memref<16x128xf32, #tpu.memory_space<vmem>>, vector<8x128xf32>,
    %c8_22 = arith.constant 8 : index
    %c0_23 = arith.constant 0 : index
    %187 = vector.load %arg4[%c8_22, %c0_23] : memref<16x128xf32, #tpu.memory_space<vmem>>, vector<8x128xf32>
    tpu.vector_store %arg4[%c8_22, %c0_23], %180 {strides = array<i32>} : memref<16x128xf32, #tpu.memory_space<vmem>>, vector<8x128xf32>,
    return
  }
  func.func @transform_0(%arg0: i32) -> (i32, i32) {
    %c0_i32 = arith.constant 0 : i32
    %c0_i32_0 = arith.constant 0 : i32
    return %c0_i32, %arg0 : i32, i32
  }
  func.func @transform_1(%arg0: i32) -> (i32, i32) {
    %c0_i32 = arith.constant 0 : i32
    %c0_i32_0 = arith.constant 0 : i32
    %c0_i32_1 = arith.constant 0 : i32
    return %c0_i32, %c0_i32_0 : i32, i32
  }
  func.func @transform_2(%arg0: i32) -> (i32, i32) {
    %c0_i32 = arith.constant 0 : i32
    %c0_i32_0 = arith.constant 0 : i32
    %c0_i32_1 = arith.constant 0 : i32
    return %c0_i32, %c0_i32_0 : i32, i32
  }
  func.func @transform_3(%arg0: i32) -> (i32, i32) {
    %c0_i32 = arith.constant 0 : i32
    %c0_i32_0 = arith.constant 0 : i32
    return %c0_i32, %arg0 : i32, i32
  }
}

</mosaic_0001>

<llo_original>
// kernel: dilate_erode.1
$region0: #{dilate_erode.1}
  #allocation0 [shape = 'u32[]', space=smem, size = 0x4, offset = 0x4, fixed_abs, tag = 'smem constant byte address 0x4 - core index']
  #allocation1 [shape = 'u32[144,128]{1,0:T(1,128)}', space=vmem, size = 0x12000, scoped, tag = 'internal scratch']
  %s0 = inlined_call_operand.vmem [shape: f32[16,128], index: 0, kind: input, shape index: {}]
  %s1 = inlined_call_operand.vmem [shape: f32[8,17], index: 1, kind: input, shape index: {}]
  %s2 = inlined_call_operand.vmem [shape: f32[8,17], index: 2, kind: input, shape index: {}]
  %s3 = inlined_call_operand.vmem [shape: f32[16,128], index: 3, kind: output, shape index: {}]
  %s4 = sld [smem:[#allocation0]]
  $region22: #{dilate_erode.1} parent=0
    _
  %s6 = ssub.s32 1, %s4
  %s7 = scalar_select 0, %s6, %s4
  // Predicated region
  $region2: #{dilate_erode.1} parent=0 // pred_check
    _
  $region3: #{dilate_erode.1} parent=0 // pred_check_branch
    %9 = sbr.rel (0) target = $region5
  $region4: #{dilate_erode.1} parent=0 // pred_region
    _
  $region5: #{dilate_erode.1} parent=0 // pred_fallthru
    _
  // Predicated region
  $region6: #{dilate_erode.1} parent=0 // pred_check
    _
  $region7: #{dilate_erode.1} parent=0 // pred_check_branch
    %11 = sbr.rel (0) target = $region9
  $region8: #{dilate_erode.1} parent=0 // pred_region
    _
  $region9: #{dilate_erode.1} parent=0 // pred_fallthru
    _
  // Predicated region
  $region10: #{dilate_erode.1} parent=0 // pred_check
    _
  $region11: #{dilate_erode.1} parent=0 // pred_check_branch
    %13 = sbr.rel (0) target = $region13
  $region12: #{dilate_erode.1} parent=0 // pred_region
    _
  $region13: #{dilate_erode.1} parent=0 // pred_fallthru
    _
  %v14 = vld [vmem:[%s1] sm:$0xff]
  %v15 = vld [vmem:[%s2] sm:$0xff]
  %17 = vset.pattern.permute.xlu0 16
  %18 = vperm.xlu0 %17, %v14
  %v19 = vpop.permute.xlu0 %18
  %v21 = vsub.f32 0.0, %v15
  %23 = vset.pattern.permute.xlu0 16
  %24 = vperm.xlu0 %23, %v21
  %v25 = vpop.permute.xlu0 %24
  %v27 = vld [vmem:[%s0] sm:$0x1]
  %v28 = vlaneseq
  %v29 = vshrl.u32 %v28, 7
  %v30 = vsub.s32 0, %v29
  %v31 = vrot.slane %v27, %v30
  %32 = vset.pattern.permute.xlu0 0
  %33 = vperm.xlu0 %32, %v14
  %v34 = vpop.permute.xlu0 %33
  %v36 = vadd.f32 %v31, %v34
  %v37 = vmax.f32 %v19, %v36
  %39 = vset.pattern.permute.xlu0 0
  %40 = vperm.xlu0 %39, %v15
  %v41 = vpop.permute.xlu0 %40
  %v43 = vsub.f32 %v31, %v41
  %v44 = vmin.f32 %v25, %v43
  %v45 = vld [vmem:[%s0 + $0x1] sm:$0x1]
  %v46 = vlaneseq
  %v47 = vshrl.u32 %v46, 7
  %v48 = vsub.s32 0, %v47
  %v49 = vrot.slane %v45, %v48
  %50 = vset.pattern.permute.xlu0 1
  %51 = vperm.xlu0 %50, %v14
  %v52 = vpop.permute.xlu0 %51
  %v54 = vadd.f32 %v49, %v52
  %v55 = vmax.f32 %v37, %v54
  %56 = vset.pattern.permute.xlu0 1
  %57 = vperm.xlu0 %56, %v15
  %v58 = vpop.permute.xlu0 %57
  %v60 = vsub.f32 %v49, %v58
  %v61 = vmin.f32 %v44, %v60
  %v62 = vld [vmem:[%s0 + $0x2] sm:$0x1]
  %v63 = vlaneseq
  %v64 = vshrl.u32 %v63, 7
  %v65 = vsub.s32 0, %v64
  %v66 = vrot.slane %v62, %v65
  %67 = vset.pattern.permute.xlu0 2
  %68 = vperm.xlu0 %67, %v14
  %v69 = vpop.permute.xlu0 %68
  %v71 = vadd.f32 %v66, %v69
  %v72 = vmax.f32 %v55, %v71
  %73 = vset.pattern.permute.xlu0 2
  %74 = vperm.xlu0 %73, %v15
  %v75 = vpop.permute.xlu0 %74
  %v77 = vsub.f32 %v66, %v75
  %v78 = vmin.f32 %v61, %v77
  %v79 = vld [vmem:[%s0 + $0x3] sm:$0x1]
  %v80 = vlaneseq
  %v81 = vshrl.u32 %v80, 7
  %v82 = vsub.s32 0, %v81
  %v83 = vrot.slane %v79, %v82
  %84 = vset.pattern.permute.xlu0 3
  %85 = vperm.xlu0 %84, %v14
  %v86 = vpop.permute.xlu0 %85
  %v88 = vadd.f32 %v83, %v86
  %v89 = vmax.f32 %v72, %v88
  %90 = vset.pattern.permute.xlu0 3
  %91 = vperm.xlu0 %90, %v15
  %v92 = vpop.permute.xlu0 %91
  %v94 = vsub.f32 %v83, %v92
  %v95 = vmin.f32 %v78, %v94
  %v96 = vld [vmem:[%s0 + $0x4] sm:$0x1]
  %v97 = vlaneseq
  %v98 = vshrl.u32 %v97, 7
  %v99 = vsub.s32 0, %v98
  %v100 = vrot.slane %v96, %v99
  %101 = vset.pattern.permute.xlu0 4
  %102 = vperm.xlu0 %101, %v14
  %v103 = vpop.permute.xlu0 %102
  %v105 = vadd.f32 %v100, %v103
  %v106 = vmax.f32 %v89, %v105
  %107 = vset.pattern.permute.xlu0 4
  %108 = vperm.xlu0 %107, %v15
  %v109 = vpop.permute.xlu0 %108
  %v111 = vsub.f32 %v100, %v109
  %v112 = vmin.f32 %v95, %v111
  %v113 = vld [vmem:[%s0 + $0x5] sm:$0x1]
  %v114 = vlaneseq
  %v115 = vshrl.u32 %v114, 7
  %v116 = vsub.s32 0, %v115
  %v117 = vrot.slane %v113, %v116
  %118 = vset.pattern.permute.xlu0 5
  %119 = vperm.xlu0 %118, %v14
  %v120 = vpop.permute.xlu0 %119
  %v122 = vadd.f32 %v117, %v120
  %v123 = vmax.f32 %v106, %v122
  %124 = vset.pattern.permute.xlu0 5
  %125 = vperm.xlu0 %124, %v15
  %v126 = vpop.permute.xlu0 %125
  %v128 = vsub.f32 %v117, %v126
  %v129 = vmin.f32 %v112, %v128
  %v130 = vld [vmem:[%s0 + $0x6] sm:$0x1]
  %v131 = vlaneseq
  %v132 = vshrl.u32 %v131, 7
  %v133 = vsub.s32 0, %v132
  %v134 = vrot.slane %v130, %v133
  %135 = vset.pattern.permute.xlu0 6
  %136 = vperm.xlu0 %135, %v14
  %v137 = vpop.permute.xlu0 %136
  %v139 = vadd.f32 %v134, %v137
  %v140 = vmax.f32 %v123, %v139
  %141 = vset.pattern.permute.xlu0 6
  %142 = vperm.xlu0 %141, %v15
  %v143 = vpop.permute.xlu0 %142
  %v145 = vsub.f32 %v134, %v143
  %v146 = vmin.f32 %v129, %v145
  %v147 = vld [vmem:[%s0 + $0x7] sm:$0x1]
  %v148 = vlaneseq
  %v149 = vshrl.u32 %v148, 7
  %v150 = vsub.s32 0, %v149
  %v151 = vrot.slane %v147, %v150
  %152 = vset.pattern.permute.xlu0 7
  %153 = vperm.xlu0 %152, %v14
  %v154 = vpop.permute.xlu0 %153
  %v156 = vadd.f32 %v151, %v154
  %v157 = vmax.f32 %v140, %v156
  %158 = vset.pattern.permute.xlu0 7
  %159 = vperm.xlu0 %158, %v15
  %v160 = vpop.permute.xlu0 %159
  %v162 = vsub.f32 %v151, %v160
  %v163 = vmin.f32 %v146, %v162
  %v164 = vld [vmem:[%s0 + $0x8] sm:$0x1]
  %v165 = vlaneseq
  %v166 = vshrl.u32 %v165, 7
  %v167 = vsub.s32 0, %v166
  %v168 = vrot.slane %v164, %v167
  %169 = vset.pattern.permute.xlu0 8
  %170 = vperm.xlu0 %169, %v14
  %v171 = vpop.permute.xlu0 %170
  %v173 = vadd.f32 %v168, %v171
  %v174 = vmax.f32 %v157, %v173
  %175 = vset.pattern.permute.xlu0 8
  %176 = vperm.xlu0 %175, %v15
  %v177 = vpop.permute.xlu0 %176
  %v179 = vsub.f32 %v168, %v177
  %v180 = vmin.f32 %v163, %v179
  %v181 = vld [vmem:[%s0 + $0x9] sm:$0x1]
  %v182 = vlaneseq
  %v183 = vshrl.u32 %v182, 7
  %v184 = vsub.s32 0, %v183
  %v185 = vrot.slane %v181, %v184
  %186 = vset.pattern.permute.xlu0 9
  %187 = vperm.xlu0 %186, %v14
  %v188 = vpop.permute.xlu0 %187
  %v190 = vadd.f32 %v185, %v188
  %v191 = vmax.f32 %v174, %v190
  %192 = vset.pattern.permute.xlu0 9
  %193 = vperm.xlu0 %192, %v15
  %v194 = vpop.permute.xlu0 %193
  %v196 = vsub.f32 %v185, %v194
  %v197 = vmin.f32 %v180, %v196
  %v198 = vld [vmem:[%s0 + $0xa] sm:$0x1]
  %v199 = vlaneseq
  %v200 = vshrl.u32 %v199, 7
  %v201 = vsub.s32 0, %v200
  %v202 = vrot.slane %v198, %v201
  %203 = vset.pattern.permute.xlu0 10
  %204 = vperm.xlu0 %203, %v14
  %v205 = vpop.permute.xlu0 %204
  %v207 = vadd.f32 %v202, %v205
  %v208 = vmax.f32 %v191, %v207
  %209 = vset.pattern.permute.xlu0 10
  %210 = vperm.xlu0 %209, %v15
  %v211 = vpop.permute.xlu0 %210
  %v213 = vsub.f32 %v202, %v211
  %v214 = vmin.f32 %v197, %v213
  %v215 = vld [vmem:[%s0 + $0xb] sm:$0x1]
  %v216 = vlaneseq
  %v217 = vshrl.u32 %v216, 7
  %v218 = vsub.s32 0, %v217
  %v219 = vrot.slane %v215, %v218
  %220 = vset.pattern.permute.xlu0 11
  %221 = vperm.xlu0 %220, %v14
  %v222 = vpop.permute.xlu0 %221
  %v224 = vadd.f32 %v219, %v222
  %v225 = vmax.f32 %v208, %v224
  %226 = vset.pattern.permute.xlu0 11
  %227 = vperm.xlu0 %226, %v15
  %v228 = vpop.permute.xlu0 %227
  %v230 = vsub.f32 %v219, %v228
  %v231 = vmin.f32 %v214, %v230
  %v232 = vld [vmem:[%s0 + $0xc] sm:$0x1]
  %v233 = vlaneseq
  %v234 = vshrl.u32 %v233, 7
  %v235 = vsub.s32 0, %v234
  %v236 = vrot.slane %v232, %v235
  %237 = vset.pattern.permute.xlu0 12
  %238 = vperm.xlu0 %237, %v14
  %v239 = vpop.permute.xlu0 %238
  %v241 = vadd.f32 %v236, %v239
  %v242 = vmax.f32 %v225, %v241
  %243 = vset.pattern.permute.xlu0 12
  %244 = vperm.xlu0 %243, %v15
  %v245 = vpop.permute.xlu0 %244
  %v247 = vsub.f32 %v236, %v245
  %v248 = vmin.f32 %v231, %v247
  %v249 = vld [vmem:[%s0 + $0xd] sm:$0x1]
  %v250 = vlaneseq
  %v251 = vshrl.u32 %v250, 7
  %v252 = vsub.s32 0, %v251
  %v253 = vrot.slane %v249, %v252
  %254 = vset.pattern.permute.xlu0 13
  %255 = vperm.xlu0 %254, %v14
  %v256 = vpop.permute.xlu0 %255
  %v258 = vadd.f32 %v253, %v256
  %v259 = vmax.f32 %v242, %v258
  %260 = vset.pattern.permute.xlu0 13
  %261 = vperm.xlu0 %260, %v15
  %v262 = vpop.permute.xlu0 %261
  %v264 = vsub.f32 %v253, %v262
  %v265 = vmin.f32 %v248, %v264
  %v266 = vld [vmem:[%s0 + $0xe] sm:$0x1]
  %v267 = vlaneseq
  %v268 = vshrl.u32 %v267, 7
  %v269 = vsub.s32 0, %v268
  %v270 = vrot.slane %v266, %v269
  %271 = vset.pattern.permute.xlu0 14
  %272 = vperm.xlu0 %271, %v14
  %v273 = vpop.permute.xlu0 %272
  %v275 = vadd.f32 %v270, %v273
  %v276 = vmax.f32 %v259, %v275
  %277 = vset.pattern.permute.xlu0 14
  %278 = vperm.xlu0 %277, %v15
  %v279 = vpop.permute.xlu0 %278
  %v281 = vsub.f32 %v270, %v279
  %v282 = vmin.f32 %v265, %v281
  %v283 = vld [vmem:[%s0 + $0xf] sm:$0x1]
  %v284 = vlaneseq
  %v285 = vshrl.u32 %v284, 7
  %v286 = vsub.s32 0, %v285
  %v287 = vrot.slane %v283, %v286
  %288 = vset.pattern.permute.xlu0 15
  %289 = vperm.xlu0 %288, %v14
  %v290 = vpop.permute.xlu0 %289
  %v292 = vadd.f32 %v287, %v290
  %v293 = vmax.f32 %v276, %v292
  %294 = vset.pattern.permute.xlu0 15
  %295 = vperm.xlu0 %294, %v15
  %v296 = vpop.permute.xlu0 %295
  %v298 = vsub.f32 %v287, %v296
  %v299 = vmin.f32 %v282, %v298
  %300 = vst [vmem:[%s3] sm:$0xff] %v299
  %301 = vst [vmem:[%s3 + $0x8] sm:$0xff] %v293
  // Predicated region
  $region14: #{dilate_erode.1} parent=0 // pred_check
    _
  $region15: #{dilate_erode.1} parent=0 // pred_check_branch
    %303 = sbr.rel (0) target = $region17
  $region16: #{dilate_erode.1} parent=0 // pred_region
    _
  $region17: #{dilate_erode.1} parent=0 // pred_fallthru
    _
  // Predicated region
  $region18: #{dilate_erode.1} parent=0 // pred_check
    _
  $region19: #{dilate_erode.1} parent=0 // pred_check_branch
    %305 = sbr.rel (0) target = $region21
  $region20: #{dilate_erode.1} parent=0 // pred_region
    _
  $region21: #{dilate_erode.1} parent=0 // pred_fallthru
    _

</llo_original>
